<compile_context>
chip_gen: v7x
topology: tpu7x:2x2x1
jax: 0.10.0
libtpu: 0.0.40
codegen_flags: <defaults>
</compile_context>

<pallas_src>
import jax
import jax.numpy as jnp
from jax.experimental import pallas as pl
from jax.experimental.pallas import tpu as pltpu


def classifier_kernel(ids_ref, emb_ref, w1_ref, b1_ref, w2_ref, b2_ref,
                      out_ref, pooled_ref):
    # ids_ref: [B_pad, S] int32 in SMEM (scalar prefetch)
    # emb_ref: [V, E], w1_ref: [E, H], b1_ref: [1, H], w2_ref: [H, O_pad],
    # b2_ref: [1, O_pad]  -- all VMEM-resident (constant index_maps)
    # out_ref: [TB, O_pad], pooled_ref: [TB, E] VMEM scratch
    tile_b, emb_dim = pooled_ref.shape
    seq_len = ids_ref.shape[1]
    base = pl.program_id(0) * tile_b
    inv_s = jnp.float32(1.0 / seq_len)

    # Gather + mean-pool: per batch row, S dynamic-row loads from the embedding
    # table accumulated on the VPU.  No [B, S, V] one-hot is ever built, so the
    # kernel scales with E, not V.
    # TODO(synk): for large tile_b, switch the static Python unroll over rows
    #             to a lax.fori_loop with a dynamic pooled_ref store.
    for b in range(tile_b):                 # static unroll (tile_b is small)
        acc = jnp.zeros((1, emb_dim), jnp.float32)
        for s in range(seq_len):            # static unroll over sequence
            tok = ids_ref[base + b, s]                          # SMEM scalar read
            acc = acc + emb_ref[pl.ds(tok, 1), :].astype(jnp.float32)
        pooled_ref[pl.ds(b, 1), :] = acc * inv_s                # fold 1/S here

    pooled = pooled_ref[...]                                    # [TB, E]

    # fc1 + ReLU (MXU matmul, f32 accumulation)
    hidden = jnp.dot(pooled, w1_ref[...],
                     preferred_element_type=jnp.float32) + b1_ref[...]
    hidden = jnp.maximum(hidden, 0.0)                           # [TB, H]

    # fc2 + Sigmoid, lane-dense [TB, O_pad] store
    logits = jnp.dot(hidden, w2_ref[...],
                     preferred_element_type=jnp.float32) + b2_ref[...]
    out_ref[...] = jax.nn.sigmoid(logits)


def classifier_forward(ids, emb_table, w1, b1, w2, b2, *, tile_b=8, lane=128):
    B, S = ids.shape
    V, E = emb_table.shape
    H = w1.shape[1]
    O = w2.shape[1]

    # Pad batch to a multiple of the batch tile and the output feature dim to a
    # lane-dense width (multiple of 128).  Padding rows/cols are sliced off.
    B_pad = pl.cdiv(B, tile_b) * tile_b
    O_pad = pl.cdiv(O, lane) * lane

    ids_p = jnp.zeros((B_pad, S), jnp.int32).at[:B].set(ids.astype(jnp.int32))
    w2_p = jnp.zeros((H, O_pad), w2.dtype).at[:, :O].set(w2)
    b2_p = jnp.zeros((1, O_pad), b2.dtype).at[:, :O].set(b2)

    grid = (B_pad // tile_b,)

    # Rough cost hint: gather-accumulate + two dense layers + sigmoid.
    flops = int(B_pad * S * E + 2 * B_pad * (E * H + H * O_pad))
    bytes_accessed = int(4 * (ids_p.size + emb_table.size + w1.size + b1.size
                              + w2_p.size + b2_p.size + B_pad * O_pad))
    cost = pl.CostEstimate(flops=flops,
                           transcendentals=int(B_pad * O_pad),
                           bytes_accessed=bytes_accessed)

    grid_spec = pltpu.PrefetchScalarGridSpec(
        num_scalar_prefetch=1,                     # ids -> SMEM
        grid=grid,
        in_specs=[
            pl.BlockSpec((V, E), lambda i, ids_ref: (0, 0)),       # emb resident
            pl.BlockSpec((E, H), lambda i, ids_ref: (0, 0)),       # w1 resident
            pl.BlockSpec((1, H), lambda i, ids_ref: (0, 0)),       # b1 resident
            pl.BlockSpec((H, O_pad), lambda i, ids_ref: (0, 0)),   # w2 resident
            pl.BlockSpec((1, O_pad), lambda i, ids_ref: (0, 0)),   # b2 resident
        ],
        out_specs=pl.BlockSpec((tile_b, O_pad), lambda i, ids_ref: (i, 0)),
        scratch_shapes=[pltpu.VMEM((tile_b, E), jnp.float32)],
    )

    out = pl.pallas_call(
        classifier_kernel,
        out_shape=jax.ShapeDtypeStruct((B_pad, O_pad), jnp.float32),
        grid_spec=grid_spec,
        compiler_params=pltpu.CompilerParams(
            dimension_semantics=("parallel",),     # batch tiles shard across TCs
        ),
        cost_estimate=cost,
    )(ids_p, emb_table, w1, b1, w2_p, b2_p)

    return out[:B, :O]


def reference_forward(ids, emb_table, w1, b1, w2, b2):
    embedded = jnp.take(emb_table, ids, axis=0)     # [B, S, E]
    pooled = embedded.mean(axis=1)                  # [B, E]
    hidden = jax.nn.relu(pooled @ w1 + b1)          # [B, H]
    return jax.nn.sigmoid(hidden @ w2 + b2)         # [B, O]


if __name__ == "__main__":
    # small, module-consistent shapes
    V = 32    # input_dim  (vocab size)
    E = 16    # embedding_dim
    H = 32    # hidden_dim
    O = 8     # output_dim
    B = 2     # batch
    S = 8     # sequence length

    key = jax.random.PRNGKey(0)
    k_ids, k_emb, k_w1, k_b1, k_w2, k_b2 = jax.random.split(key, 6)

    ids = jax.random.randint(k_ids, (B, S), 0, V, dtype=jnp.int32)
    emb_table = jax.random.normal(k_emb, (V, E), dtype=jnp.float32)
    w1 = jax.random.normal(k_w1, (E, H), dtype=jnp.float32) * 0.1
    b1 = jax.random.normal(k_b1, (1, H), dtype=jnp.float32) * 0.1
    w2 = jax.random.normal(k_w2, (H, O), dtype=jnp.float32) * 0.1
    b2 = jax.random.normal(k_b2, (1, O), dtype=jnp.float32) * 0.1

    out = classifier_forward(ids, emb_table, w1, b1, w2, b2)
    out = jax.block_until_ready(out)

    ref = reference_forward(ids, emb_table, w1, b1, w2, b2)
    assert out.shape == (B, O)
    assert jnp.allclose(out, ref, atol=1e-5, rtol=1e-5), "mismatch vs reference"

    print("KERNEL_OK")
</pallas_src>

<mosaic_0001>
module attributes {stable_mosaic.version = 11 : i64} {
  func.func @classifier_kernel(%arg0: i32, %arg1: memref<8x8xi32, #tpu.memory_space<smem>>, %arg2: memref<32x16xf32, #tpu.memory_space<vmem>>, %arg3: memref<16x32xf32, #tpu.memory_space<vmem>>, %arg4: memref<1x32xf32, #tpu.memory_space<vmem>>, %arg5: memref<32x128xf32, #tpu.memory_space<vmem>>, %arg6: memref<1x128xf32, #tpu.memory_space<vmem>>, %arg7: memref<8x128xf32, #tpu.memory_space<vmem>>, %arg8: memref<8x16xf32, #tpu.memory_space<vmem>>) attributes {dimension_semantics = [#tpu.dimension_semantics<parallel>], iteration_bounds = array<i64: 1>, scalar_prefetch = 1 : i64, scratch_operands = 1 : i64, tpu.core_type = #tpu.core_type<tc>, window_params = [{pipeline_mode = #tpu.pipeline_mode<synchronous>, transform_indices = @transform_0, window_bounds = array<i64: 32, 16>}, {pipeline_mode = #tpu.pipeline_mode<synchronous>, transform_indices = @transform_1, window_bounds = array<i64: 16, 32>}, {pipeline_mode = #tpu.pipeline_mode<synchronous>, transform_indices = @transform_2, window_bounds = array<i64: 1, 32>}, {pipeline_mode = #tpu.pipeline_mode<synchronous>, transform_indices = @transform_3, window_bounds = array<i64: 32, 128>}, {pipeline_mode = #tpu.pipeline_mode<synchronous>, transform_indices = @transform_4, window_bounds = array<i64: 1, 128>}, {transform_indices = @transform_5, window_bounds = array<i64: 8, 128>}]} {
    %c8_i32 = arith.constant 8 : i32
    %0 = arith.muli %arg0, %c8_i32 : i32
    %cst = arith.constant 0.000000e+00 : f32
    %1 = vector.broadcast %cst : f32 to vector<1x16xf32>
    %c0_i32 = arith.constant 0 : i32
    %2 = arith.addi %0, %c0_i32 : i32
    %3 = arith.index_cast %2 : i32 to index
    %c0 = arith.constant 0 : index
    %4 = memref.load %arg1[%3, %c0] : memref<8x8xi32, #tpu.memory_space<smem>>
    %5 = arith.index_cast %4 : i32 to index
    %c0_0 = arith.constant 0 : index
    %6 = vector.load %arg2[%5, %c0_0] : memref<32x16xf32, #tpu.memory_space<vmem>>, vector<1x16xf32>
    %7 = arith.addf %1, %6 : vector<1x16xf32>
    %c0_i32_1 = arith.constant 0 : i32
    %8 = arith.addi %0, %c0_i32_1 : i32
    %9 = arith.index_cast %8 : i32 to index
    %c1 = arith.constant 1 : index
    %10 = memref.load %arg1[%9, %c1] : memref<8x8xi32, #tpu.memory_space<smem>>
    %11 = arith.index_cast %10 : i32 to index
    %c0_2 = arith.constant 0 : index
    %12 = vector.load %arg2[%11, %c0_2] : memref<32x16xf32, #tpu.memory_space<vmem>>, vector<1x16xf32>
    %13 = arith.addf %7, %12 : vector<1x16xf32>
    %c0_i32_3 = arith.constant 0 : i32
    %14 = arith.addi %0, %c0_i32_3 : i32
    %15 = arith.index_cast %14 : i32 to index
    %c2 = arith.constant 2 : index
    %16 = memref.load %arg1[%15, %c2] : memref<8x8xi32, #tpu.memory_space<smem>>
    %17 = arith.index_cast %16 : i32 to index
    %c0_4 = arith.constant 0 : index
    %18 = vector.load %arg2[%17, %c0_4] : memref<32x16xf32, #tpu.memory_space<vmem>>, vector<1x16xf32>
    %19 = arith.addf %13, %18 : vector<1x16xf32>
    %c0_i32_5 = arith.constant 0 : i32
    %20 = arith.addi %0, %c0_i32_5 : i32
    %21 = arith.index_cast %20 : i32 to index
    %c3 = arith.constant 3 : index
    %22 = memref.load %arg1[%21, %c3] : memref<8x8xi32, #tpu.memory_space<smem>>
    %23 = arith.index_cast %22 : i32 to index
    %c0_6 = arith.constant 0 : index
    %24 = vector.load %arg2[%23, %c0_6] : memref<32x16xf32, #tpu.memory_space<vmem>>, vector<1x16xf32>
    %25 = arith.addf %19, %24 : vector<1x16xf32>
    %c0_i32_7 = arith.constant 0 : i32
    %26 = arith.addi %0, %c0_i32_7 : i32
    %27 = arith.index_cast %26 : i32 to index
    %c4 = arith.constant 4 : index
    %28 = memref.load %arg1[%27, %c4] : memref<8x8xi32, #tpu.memory_space<smem>>
    %29 = arith.index_cast %28 : i32 to index
    %c0_8 = arith.constant 0 : index
    %30 = vector.load %arg2[%29, %c0_8] : memref<32x16xf32, #tpu.memory_space<vmem>>, vector<1x16xf32>
    %31 = arith.addf %25, %30 : vector<1x16xf32>
    %c0_i32_9 = arith.constant 0 : i32
    %32 = arith.addi %0, %c0_i32_9 : i32
    %33 = arith.index_cast %32 : i32 to index
    %c5 = arith.constant 5 : index
    %34 = memref.load %arg1[%33, %c5] : memref<8x8xi32, #tpu.memory_space<smem>>
    %35 = arith.index_cast %34 : i32 to index
    %c0_10 = arith.constant 0 : index
    %36 = vector.load %arg2[%35, %c0_10] : memref<32x16xf32, #tpu.memory_space<vmem>>, vector<1x16xf32>
    %37 = arith.addf %31, %36 : vector<1x16xf32>
    %c0_i32_11 = arith.constant 0 : i32
    %38 = arith.addi %0, %c0_i32_11 : i32
    %39 = arith.index_cast %38 : i32 to index
    %c6 = arith.constant 6 : index
    %40 = memref.load %arg1[%39, %c6] : memref<8x8xi32, #tpu.memory_space<smem>>
    %41 = arith.index_cast %40 : i32 to index
    %c0_12 = arith.constant 0 : index
    %42 = vector.load %arg2[%41, %c0_12] : memref<32x16xf32, #tpu.memory_space<vmem>>, vector<1x16xf32>
    %43 = arith.addf %37, %42 : vector<1x16xf32>
    %c0_i32_13 = arith.constant 0 : i32
    %44 = arith.addi %0, %c0_i32_13 : i32
    %45 = arith.index_cast %44 : i32 to index
    %c7 = arith.constant 7 : index
    %46 = memref.load %arg1[%45, %c7] : memref<8x8xi32, #tpu.memory_space<smem>>
    %47 = arith.index_cast %46 : i32 to index
    %c0_14 = arith.constant 0 : index
    %48 = vector.load %arg2[%47, %c0_14] : memref<32x16xf32, #tpu.memory_space<vmem>>, vector<1x16xf32>
    %49 = arith.addf %43, %48 : vector<1x16xf32>
    %cst_15 = arith.constant 1.250000e-01 : f32
    %50 = vector.broadcast %cst_15 : f32 to vector<1x16xf32>
    %51 = arith.mulf %49, %50 : vector<1x16xf32>
    %c0_16 = arith.constant 0 : index
    %c0_17 = arith.constant 0 : index
    %52 = vector.load %arg8[%c0_16, %c0_17] : memref<8x16xf32, #tpu.memory_space<vmem>>, vector<1x16xf32>
    tpu.vector_store %arg8[%c0_16, %c0_17], %51 {strides = array<i32>} : memref<8x16xf32, #tpu.memory_space<vmem>>, vector<1x16xf32>,
    %cst_18 = arith.constant 0.000000e+00 : f32
    %53 = vector.broadcast %cst_18 : f32 to vector<1x16xf32>
    %c1_i32 = arith.constant 1 : i32
    %54 = arith.addi %0, %c1_i32 : i32
    %55 = arith.index_cast %54 : i32 to index
    %c0_19 = arith.constant 0 : index
    %56 = memref.load %arg1[%55, %c0_19] : memref<8x8xi32, #tpu.memory_space<smem>>
    %57 = arith.index_cast %56 : i32 to index
    %c0_20 = arith.constant 0 : index
    %58 = vector.load %arg2[%57, %c0_20] : memref<32x16xf32, #tpu.memory_space<vmem>>, vector<1x16xf32>
    %59 = arith.addf %53, %58 : vector<1x16xf32>
    %c1_i32_21 = arith.constant 1 : i32
    %60 = arith.addi %0, %c1_i32_21 : i32
    %61 = arith.index_cast %60 : i32 to index
    %c1_22 = arith.constant 1 : index
    %62 = memref.load %arg1[%61, %c1_22] : memref<8x8xi32, #tpu.memory_space<smem>>
    %63 = arith.index_cast %62 : i32 to index
    %c0_23 = arith.constant 0 : index
    %64 = vector.load %arg2[%63, %c0_23] : memref<32x16xf32, #tpu.memory_space<vmem>>, vector<1x16xf32>
    %65 = arith.addf %59, %64 : vector<1x16xf32>
    %c1_i32_24 = arith.constant 1 : i32
    %66 = arith.addi %0, %c1_i32_24 : i32
    %67 = arith.index_cast %66 : i32 to index
    %c2_25 = arith.constant 2 : index
    %68 = memref.load %arg1[%67, %c2_25] : memref<8x8xi32, #tpu.memory_space<smem>>
    %69 = arith.index_cast %68 : i32 to index
    %c0_26 = arith.constant 0 : index
    %70 = vector.load %arg2[%69, %c0_26] : memref<32x16xf32, #tpu.memory_space<vmem>>, vector<1x16xf32>
    %71 = arith.addf %65, %70 : vector<1x16xf32>
    %c1_i32_27 = arith.constant 1 : i32
    %72 = arith.addi %0, %c1_i32_27 : i32
    %73 = arith.index_cast %72 : i32 to index
    %c3_28 = arith.constant 3 : index
    %74 = memref.load %arg1[%73, %c3_28] : memref<8x8xi32, #tpu.memory_space<smem>>
    %75 = arith.index_cast %74 : i32 to index
    %c0_29 = arith.constant 0 : index
    %76 = vector.load %arg2[%75, %c0_29] : memref<32x16xf32, #tpu.memory_space<vmem>>, vector<1x16xf32>
    %77 = arith.addf %71, %76 : vector<1x16xf32>
    %c1_i32_30 = arith.constant 1 : i32
    %78 = arith.addi %0, %c1_i32_30 : i32
    %79 = arith.index_cast %78 : i32 to index
    %c4_31 = arith.constant 4 : index
    %80 = memref.load %arg1[%79, %c4_31] : memref<8x8xi32, #tpu.memory_space<smem>>
    %81 = arith.index_cast %80 : i32 to index
    %c0_32 = arith.constant 0 : index
    %82 = vector.load %arg2[%81, %c0_32] : memref<32x16xf32, #tpu.memory_space<vmem>>, vector<1x16xf32>
    %83 = arith.addf %77, %82 : vector<1x16xf32>
    %c1_i32_33 = arith.constant 1 : i32
    %84 = arith.addi %0, %c1_i32_33 : i32
    %85 = arith.index_cast %84 : i32 to index
    %c5_34 = arith.constant 5 : index
    %86 = memref.load %arg1[%85, %c5_34] : memref<8x8xi32, #tpu.memory_space<smem>>
    %87 = arith.index_cast %86 : i32 to index
    %c0_35 = arith.constant 0 : index
    %88 = vector.load %arg2[%87, %c0_35] : memref<32x16xf32, #tpu.memory_space<vmem>>, vector<1x16xf32>
    %89 = arith.addf %83, %88 : vector<1x16xf32>
    %c1_i32_36 = arith.constant 1 : i32
    %90 = arith.addi %0, %c1_i32_36 : i32
    %91 = arith.index_cast %90 : i32 to index
    %c6_37 = arith.constant 6 : index
    %92 = memref.load %arg1[%91, %c6_37] : memref<8x8xi32, #tpu.memory_space<smem>>
    %93 = arith.index_cast %92 : i32 to index
    %c0_38 = arith.constant 0 : index
    %94 = vector.load %arg2[%93, %c0_38] : memref<32x16xf32, #tpu.memory_space<vmem>>, vector<1x16xf32>
    %95 = arith.addf %89, %94 : vector<1x16xf32>
    %c1_i32_39 = arith.constant 1 : i32
    %96 = arith.addi %0, %c1_i32_39 : i32
    %97 = arith.index_cast %96 : i32 to index
    %c7_40 = arith.constant 7 : index
    %98 = memref.load %arg1[%97, %c7_40] : memref<8x8xi32, #tpu.memory_space<smem>>
    %99 = arith.index_cast %98 : i32 to index
    %c0_41 = arith.constant 0 : index
    %100 = vector.load %arg2[%99, %c0_41] : memref<32x16xf32, #tpu.memory_space<vmem>>, vector<1x16xf32>
    %101 = arith.addf %95, %100 : vector<1x16xf32>
    %cst_42 = arith.constant 1.250000e-01 : f32
    %102 = vector.broadcast %cst_42 : f32 to vector<1x16xf32>
    %103 = arith.mulf %101, %102 : vector<1x16xf32>
    %c1_43 = arith.constant 1 : index
    %c0_44 = arith.constant 0 : index
    %104 = vector.load %arg8[%c1_43, %c0_44] : memref<8x16xf32, #tpu.memory_space<vmem>>, vector<1x16xf32>
    tpu.vector_store %arg8[%c1_43, %c0_44], %103 {strides = array<i32>} : memref<8x16xf32, #tpu.memory_space<vmem>>, vector<1x16xf32>,
    %cst_45 = arith.constant 0.000000e+00 : f32
    %105 = vector.broadcast %cst_45 : f32 to vector<1x16xf32>
    %c2_i32 = arith.constant 2 : i32
    %106 = arith.addi %0, %c2_i32 : i32
    %107 = arith.index_cast %106 : i32 to index
    %c0_46 = arith.constant 0 : index
    %108 = memref.load %arg1[%107, %c0_46] : memref<8x8xi32, #tpu.memory_space<smem>>
    %109 = arith.index_cast %108 : i32 to index
    %c0_47 = arith.constant 0 : index
    %110 = vector.load %arg2[%109, %c0_47] : memref<32x16xf32, #tpu.memory_space<vmem>>, vector<1x16xf32>
    %111 = arith.addf %105, %110 : vector<1x16xf32>
    %c2_i32_48 = arith.constant 2 : i32
    %112 = arith.addi %0, %c2_i32_48 : i32
    %113 = arith.index_cast %112 : i32 to index
    %c1_49 = arith.constant 1 : index
    %114 = memref.load %arg1[%113, %c1_49] : memref<8x8xi32, #tpu.memory_space<smem>>
    %115 = arith.index_cast %114 : i32 to index
    %c0_50 = arith.constant 0 : index
    %116 = vector.load %arg2[%115, %c0_50] : memref<32x16xf32, #tpu.memory_space<vmem>>, vector<1x16xf32>
    %117 = arith.addf %111, %116 : vector<1x16xf32>
    %c2_i32_51 = arith.constant 2 : i32
    %118 = arith.addi %0, %c2_i32_51 : i32
    %119 = arith.index_cast %118 : i32 to index
    %c2_52 = arith.constant 2 : index
    %120 = memref.load %arg1[%119, %c2_52] : memref<8x8xi32, #tpu.memory_space<smem>>
    %121 = arith.index_cast %120 : i32 to index
    %c0_53 = arith.constant 0 : index
    %122 = vector.load %arg2[%121, %c0_53] : memref<32x16xf32, #tpu.memory_space<vmem>>, vector<1x16xf32>
    %123 = arith.addf %117, %122 : vector<1x16xf32>
    %c2_i32_54 = arith.constant 2 : i32
    %124 = arith.addi %0, %c2_i32_54 : i32
    %125 = arith.index_cast %124 : i32 to index
    %c3_55 = arith.constant 3 : index
    %126 = memref.load %arg1[%125, %c3_55] : memref<8x8xi32, #tpu.memory_space<smem>>
    %127 = arith.index_cast %126 : i32 to index
    %c0_56 = arith.constant 0 : index
    %128 = vector.load %arg2[%127, %c0_56] : memref<32x16xf32, #tpu.memory_space<vmem>>, vector<1x16xf32>
    %129 = arith.addf %123, %128 : vector<1x16xf32>
    %c2_i32_57 = arith.constant 2 : i32
    %130 = arith.addi %0, %c2_i32_57 : i32
    %131 = arith.index_cast %130 : i32 to index
    %c4_58 = arith.constant 4 : index
    %132 = memref.load %arg1[%131, %c4_58] : memref<8x8xi32, #tpu.memory_space<smem>>
    %133 = arith.index_cast %132 : i32 to index
    %c0_59 = arith.constant 0 : index
    %134 = vector.load %arg2[%133, %c0_59] : memref<32x16xf32, #tpu.memory_space<vmem>>, vector<1x16xf32>
    %135 = arith.addf %129, %134 : vector<1x16xf32>
    %c2_i32_60 = arith.constant 2 : i32
    %136 = arith.addi %0, %c2_i32_60 : i32
    %137 = arith.index_cast %136 : i32 to index
    %c5_61 = arith.constant 5 : index
    %138 = memref.load %arg1[%137, %c5_61] : memref<8x8xi32, #tpu.memory_space<smem>>
    %139 = arith.index_cast %138 : i32 to index
    %c0_62 = arith.constant 0 : index
    %140 = vector.load %arg2[%139, %c0_62] : memref<32x16xf32, #tpu.memory_space<vmem>>, vector<1x16xf32>
    %141 = arith.addf %135, %140 : vector<1x16xf32>
    %c2_i32_63 = arith.constant 2 : i32
    %142 = arith.addi %0, %c2_i32_63 : i32
    %143 = arith.index_cast %142 : i32 to index
    %c6_64 = arith.constant 6 : index
    %144 = memref.load %arg1[%143, %c6_64] : memref<8x8xi32, #tpu.memory_space<smem>>
    %145 = arith.index_cast %144 : i32 to index
    %c0_65 = arith.constant 0 : index
    %146 = vector.load %arg2[%145, %c0_65] : memref<32x16xf32, #tpu.memory_space<vmem>>, vector<1x16xf32>
    %147 = arith.addf %141, %146 : vector<1x16xf32>
    %c2_i32_66 = arith.constant 2 : i32
    %148 = arith.addi %0, %c2_i32_66 : i32
    %149 = arith.index_cast %148 : i32 to index
    %c7_67 = arith.constant 7 : index
    %150 = memref.load %arg1[%149, %c7_67] : memref<8x8xi32, #tpu.memory_space<smem>>
    %151 = arith.index_cast %150 : i32 to index
    %c0_68 = arith.constant 0 : index
    %152 = vector.load %arg2[%151, %c0_68] : memref<32x16xf32, #tpu.memory_space<vmem>>, vector<1x16xf32>
    %153 = arith.addf %147, %152 : vector<1x16xf32>
    %cst_69 = arith.constant 1.250000e-01 : f32
    %154 = vector.broadcast %cst_69 : f32 to vector<1x16xf32>
    %155 = arith.mulf %153, %154 : vector<1x16xf32>
    %c2_70 = arith.constant 2 : index
    %c0_71 = arith.constant 0 : index
    %156 = vector.load %arg8[%c2_70, %c0_71] : memref<8x16xf32, #tpu.memory_space<vmem>>, vector<1x16xf32>
    tpu.vector_store %arg8[%c2_70, %c0_71], %155 {strides = array<i32>} : memref<8x16xf32, #tpu.memory_space<vmem>>, vector<1x16xf32>,
    %cst_72 = arith.constant 0.000000e+00 : f32
    %157 = vector.broadcast %cst_72 : f32 to vector<1x16xf32>
    %c3_i32 = arith.constant 3 : i32
    %158 = arith.addi %0, %c3_i32 : i32
    %159 = arith.index_cast %158 : i32 to index
    %c0_73 = arith.constant 0 : index
    %160 = memref.load %arg1[%159, %c0_73] : memref<8x8xi32, #tpu.memory_space<smem>>
    %161 = arith.index_cast %160 : i32 to index
    %c0_74 = arith.constant 0 : index
    %162 = vector.load %arg2[%161, %c0_74] : memref<32x16xf32, #tpu.memory_space<vmem>>, vector<1x16xf32>
    %163 = arith.addf %157, %162 : vector<1x16xf32>
    %c3_i32_75 = arith.constant 3 : i32
    %164 = arith.addi %0, %c3_i32_75 : i32
    %165 = arith.index_cast %164 : i32 to index
    %c1_76 = arith.constant 1 : index
    %166 = memref.load %arg1[%165, %c1_76] : memref<8x8xi32, #tpu.memory_space<smem>>
    %167 = arith.index_cast %166 : i32 to index
    %c0_77 = arith.constant 0 : index
    %168 = vector.load %arg2[%167, %c0_77] : memref<32x16xf32, #tpu.memory_space<vmem>>, vector<1x16xf32>
    %169 = arith.addf %163, %168 : vector<1x16xf32>
    %c3_i32_78 = arith.constant 3 : i32
    %170 = arith.addi %0, %c3_i32_78 : i32
    %171 = arith.index_cast %170 : i32 to index
    %c2_79 = arith.constant 2 : index
    %172 = memref.load %arg1[%171, %c2_79] : memref<8x8xi32, #tpu.memory_space<smem>>
    %173 = arith.index_cast %172 : i32 to index
    %c0_80 = arith.constant 0 : index
    %174 = vector.load %arg2[%173, %c0_80] : memref<32x16xf32, #tpu.memory_space<vmem>>, vector<1x16xf32>
    %175 = arith.addf %169, %174 : vector<1x16xf32>
    %c3_i32_81 = arith.constant 3 : i32
    %176 = arith.addi %0, %c3_i32_81 : i32
    %177 = arith.index_cast %176 : i32 to index
    %c3_82 = arith.constant 3 : index
    %178 = memref.load %arg1[%177, %c3_82] : memref<8x8xi32, #tpu.memory_space<smem>>
    %179 = arith.index_cast %178 : i32 to index
    %c0_83 = arith.constant 0 : index
    %180 = vector.load %arg2[%179, %c0_83] : memref<32x16xf32, #tpu.memory_space<vmem>>, vector<1x16xf32>
    %181 = arith.addf %175, %180 : vector<1x16xf32>
    %c3_i32_84 = arith.constant 3 : i32
    %182 = arith.addi %0, %c3_i32_84 : i32
    %183 = arith.index_cast %182 : i32 to index
    %c4_85 = arith.constant 4 : index
    %184 = memref.load %arg1[%183, %c4_85] : memref<8x8xi32, #tpu.memory_space<smem>>
    %185 = arith.index_cast %184 : i32 to index
    %c0_86 = arith.constant 0 : index
    %186 = vector.load %arg2[%185, %c0_86] : memref<32x16xf32, #tpu.memory_space<vmem>>, vector<1x16xf32>
    %187 = arith.addf %181, %186 : vector<1x16xf32>
    %c3_i32_87 = arith.constant 3 : i32
    %188 = arith.addi %0, %c3_i32_87 : i32
    %189 = arith.index_cast %188 : i32 to index
    %c5_88 = arith.constant 5 : index
    %190 = memref.load %arg1[%189, %c5_88] : memref<8x8xi32, #tpu.memory_space<smem>>
    %191 = arith.index_cast %190 : i32 to index
    %c0_89 = arith.constant 0 : index
    %192 = vector.load %arg2[%191, %c0_89] : memref<32x16xf32, #tpu.memory_space<vmem>>, vector<1x16xf32>
    %193 = arith.addf %187, %192 : vector<1x16xf32>
    %c3_i32_90 = arith.constant 3 : i32
    %194 = arith.addi %0, %c3_i32_90 : i32
    %195 = arith.index_cast %194 : i32 to index
    %c6_91 = arith.constant 6 : index
    %196 = memref.load %arg1[%195, %c6_91] : memref<8x8xi32, #tpu.memory_space<smem>>
    %197 = arith.index_cast %196 : i32 to index
    %c0_92 = arith.constant 0 : index
    %198 = vector.load %arg2[%197, %c0_92] : memref<32x16xf32, #tpu.memory_space<vmem>>, vector<1x16xf32>
    %199 = arith.addf %193, %198 : vector<1x16xf32>
    %c3_i32_93 = arith.constant 3 : i32
    %200 = arith.addi %0, %c3_i32_93 : i32
    %201 = arith.index_cast %200 : i32 to index
    %c7_94 = arith.constant 7 : index
    %202 = memref.load %arg1[%201, %c7_94] : memref<8x8xi32, #tpu.memory_space<smem>>
    %203 = arith.index_cast %202 : i32 to index
    %c0_95 = arith.constant 0 : index
    %204 = vector.load %arg2[%203, %c0_95] : memref<32x16xf32, #tpu.memory_space<vmem>>, vector<1x16xf32>
    %205 = arith.addf %199, %204 : vector<1x16xf32>
    %cst_96 = arith.constant 1.250000e-01 : f32
    %206 = vector.broadcast %cst_96 : f32 to vector<1x16xf32>
    %207 = arith.mulf %205, %206 : vector<1x16xf32>
    %c3_97 = arith.constant 3 : index
    %c0_98 = arith.constant 0 : index
    %208 = vector.load %arg8[%c3_97, %c0_98] : memref<8x16xf32, #tpu.memory_space<vmem>>, vector<1x16xf32>
    tpu.vector_store %arg8[%c3_97, %c0_98], %207 {strides = array<i32>} : memref<8x16xf32, #tpu.memory_space<vmem>>, vector<1x16xf32>,
    %cst_99 = arith.constant 0.000000e+00 : f32
    %209 = vector.broadcast %cst_99 : f32 to vector<1x16xf32>
    %c4_i32 = arith.constant 4 : i32
    %210 = arith.addi %0, %c4_i32 : i32
    %211 = arith.index_cast %210 : i32 to index
    %c0_100 = arith.constant 0 : index
    %212 = memref.load %arg1[%211, %c0_100] : memref<8x8xi32, #tpu.memory_space<smem>>
    %213 = arith.index_cast %212 : i32 to index
    %c0_101 = arith.constant 0 : index
    %214 = vector.load %arg2[%213, %c0_101] : memref<32x16xf32, #tpu.memory_space<vmem>>, vector<1x16xf32>
    %215 = arith.addf %209, %214 : vector<1x16xf32>
    %c4_i32_102 = arith.constant 4 : i32
    %216 = arith.addi %0, %c4_i32_102 : i32
    %217 = arith.index_cast %216 : i32 to index
    %c1_103 = arith.constant 1 : index
    %218 = memref.load %arg1[%217, %c1_103] : memref<8x8xi32, #tpu.memory_space<smem>>
    %219 = arith.index_cast %218 : i32 to index
    %c0_104 = arith.constant 0 : index
    %220 = vector.load %arg2[%219, %c0_104] : memref<32x16xf32, #tpu.memory_space<vmem>>, vector<1x16xf32>
    %221 = arith.addf %215, %220 : vector<1x16xf32>
    %c4_i32_105 = arith.constant 4 : i32
    %222 = arith.addi %0, %c4_i32_105 : i32
    %223 = arith.index_cast %222 : i32 to index
    %c2_106 = arith.constant 2 : index
    %224 = memref.load %arg1[%223, %c2_106] : memref<8x8xi32, #tpu.memory_space<smem>>
    %225 = arith.index_cast %224 : i32 to index
    %c0_107 = arith.constant 0 : index
    %226 = vector.load %arg2[%225, %c0_107] : memref<32x16xf32, #tpu.memory_space<vmem>>, vector<1x16xf32>
    %227 = arith.addf %221, %226 : vector<1x16xf32>
    %c4_i32_108 = arith.constant 4 : i32
    %228 = arith.addi %0, %c4_i32_108 : i32
    %229 = arith.index_cast %228 : i32 to index
    %c3_109 = arith.constant 3 : index
    %230 = memref.load %arg1[%229, %c3_109] : memref<8x8xi32, #tpu.memory_space<smem>>
    %231 = arith.index_cast %230 : i32 to index
    %c0_110 = arith.constant 0 : index
    %232 = vector.load %arg2[%231, %c0_110] : memref<32x16xf32, #tpu.memory_space<vmem>>, vector<1x16xf32>
    %233 = arith.addf %227, %232 : vector<1x16xf32>
    %c4_i32_111 = arith.constant 4 : i32
    %234 = arith.addi %0, %c4_i32_111 : i32
    %235 = arith.index_cast %234 : i32 to index
    %c4_112 = arith.constant 4 : index
    %236 = memref.load %arg1[%235, %c4_112] : memref<8x8xi32, #tpu.memory_space<smem>>
    %237 = arith.index_cast %236 : i32 to index
    %c0_113 = arith.constant 0 : index
    %238 = vector.load %arg2[%237, %c0_113] : memref<32x16xf32, #tpu.memory_space<vmem>>, vector<1x16xf32>
    %239 = arith.addf %233, %238 : vector<1x16xf32>
    %c4_i32_114 = arith.constant 4 : i32
    %240 = arith.addi %0, %c4_i32_114 : i32
    %241 = arith.index_cast %240 : i32 to index
    %c5_115 = arith.constant 5 : index
    %242 = memref.load %arg1[%241, %c5_115] : memref<8x8xi32, #tpu.memory_space<smem>>
    %243 = arith.index_cast %242 : i32 to index
    %c0_116 = arith.constant 0 : index
    %244 = vector.load %arg2[%243, %c0_116] : memref<32x16xf32, #tpu.memory_space<vmem>>, vector<1x16xf32>
    %245 = arith.addf %239, %244 : vector<1x16xf32>
    %c4_i32_117 = arith.constant 4 : i32
    %246 = arith.addi %0, %c4_i32_117 : i32
    %247 = arith.index_cast %246 : i32 to index
    %c6_118 = arith.constant 6 : index
    %248 = memref.load %arg1[%247, %c6_118] : memref<8x8xi32, #tpu.memory_space<smem>>
    %249 = arith.index_cast %248 : i32 to index
    %c0_119 = arith.constant 0 : index
    %250 = vector.load %arg2[%249, %c0_119] : memref<32x16xf32, #tpu.memory_space<vmem>>, vector<1x16xf32>
    %251 = arith.addf %245, %250 : vector<1x16xf32>
    %c4_i32_120 = arith.constant 4 : i32
    %252 = arith.addi %0, %c4_i32_120 : i32
    %253 = arith.index_cast %252 : i32 to index
    %c7_121 = arith.constant 7 : index
    %254 = memref.load %arg1[%253, %c7_121] : memref<8x8xi32, #tpu.memory_space<smem>>
    %255 = arith.index_cast %254 : i32 to index
    %c0_122 = arith.constant 0 : index
    %256 = vector.load %arg2[%255, %c0_122] : memref<32x16xf32, #tpu.memory_space<vmem>>, vector<1x16xf32>
    %257 = arith.addf %251, %256 : vector<1x16xf32>
    %cst_123 = arith.constant 1.250000e-01 : f32
    %258 = vector.broadcast %cst_123 : f32 to vector<1x16xf32>
    %259 = arith.mulf %257, %258 : vector<1x16xf32>
    %c4_124 = arith.constant 4 : index
    %c0_125 = arith.constant 0 : index
    %260 = vector.load %arg8[%c4_124, %c0_125] : memref<8x16xf32, #tpu.memory_space<vmem>>, vector<1x16xf32>
    tpu.vector_store %arg8[%c4_124, %c0_125], %259 {strides = array<i32>} : memref<8x16xf32, #tpu.memory_space<vmem>>, vector<1x16xf32>,
    %cst_126 = arith.constant 0.000000e+00 : f32
    %261 = vector.broadcast %cst_126 : f32 to vector<1x16xf32>
    %c5_i32 = arith.constant 5 : i32
    %262 = arith.addi %0, %c5_i32 : i32
    %263 = arith.index_cast %262 : i32 to index
    %c0_127 = arith.constant 0 : index
    %264 = memref.load %arg1[%263, %c0_127] : memref<8x8xi32, #tpu.memory_space<smem>>
    %265 = arith.index_cast %264 : i32 to index
    %c0_128 = arith.constant 0 : index
    %266 = vector.load %arg2[%265, %c0_128] : memref<32x16xf32, #tpu.memory_space<vmem>>, vector<1x16xf32>
    %267 = arith.addf %261, %266 : vector<1x16xf32>
    %c5_i32_129 = arith.constant 5 : i32
    %268 = arith.addi %0, %c5_i32_129 : i32
    %269 = arith.index_cast %268 : i32 to index
    %c1_130 = arith.constant 1 : index
    %270 = memref.load %arg1[%269, %c1_130] : memref<8x8xi32, #tpu.memory_space<smem>>
    %271 = arith.index_cast %270 : i32 to index
    %c0_131 = arith.constant 0 : index
    %272 = vector.load %arg2[%271, %c0_131] : memref<32x16xf32, #tpu.memory_space<vmem>>, vector<1x16xf32>
    %273 = arith.addf %267, %272 : vector<1x16xf32>
    %c5_i32_132 = arith.constant 5 : i32
    %274 = arith.addi %0, %c5_i32_132 : i32
    %275 = arith.index_cast %274 : i32 to index
    %c2_133 = arith.constant 2 : index
    %276 = memref.load %arg1[%275, %c2_133] : memref<8x8xi32, #tpu.memory_space<smem>>
    %277 = arith.index_cast %276 : i32 to index
    %c0_134 = arith.constant 0 : index
    %278 = vector.load %arg2[%277, %c0_134] : memref<32x16xf32, #tpu.memory_space<vmem>>, vector<1x16xf32>
    %279 = arith.addf %273, %278 : vector<1x16xf32>
    %c5_i32_135 = arith.constant 5 : i32
    %280 = arith.addi %0, %c5_i32_135 : i32
    %281 = arith.index_cast %280 : i32 to index
    %c3_136 = arith.constant 3 : index
    %282 = memref.load %arg1[%281, %c3_136] : memref<8x8xi32, #tpu.memory_space<smem>>
    %283 = arith.index_cast %282 : i32 to index
    %c0_137 = arith.constant 0 : index
    %284 = vector.load %arg2[%283, %c0_137] : memref<32x16xf32, #tpu.memory_space<vmem>>, vector<1x16xf32>
    %285 = arith.addf %279, %284 : vector<1x16xf32>
    %c5_i32_138 = arith.constant 5 : i32
    %286 = arith.addi %0, %c5_i32_138 : i32
    %287 = arith.index_cast %286 : i32 to index
    %c4_139 = arith.constant 4 : index
    %288 = memref.load %arg1[%287, %c4_139] : memref<8x8xi32, #tpu.memory_space<smem>>
    %289 = arith.index_cast %288 : i32 to index
    %c0_140 = arith.constant 0 : index
    %290 = vector.load %arg2[%289, %c0_140] : memref<32x16xf32, #tpu.memory_space<vmem>>, vector<1x16xf32>
    %291 = arith.addf %285, %290 : vector<1x16xf32>
    %c5_i32_141 = arith.constant 5 : i32
    %292 = arith.addi %0, %c5_i32_141 : i32
    %293 = arith.index_cast %292 : i32 to index
    %c5_142 = arith.constant 5 : index
    %294 = memref.load %arg1[%293, %c5_142] : memref<8x8xi32, #tpu.memory_space<smem>>
    %295 = arith.index_cast %294 : i32 to index
    %c0_143 = arith.constant 0 : index
    %296 = vector.load %arg2[%295, %c0_143] : memref<32x16xf32, #tpu.memory_space<vmem>>, vector<1x16xf32>
    %297 = arith.addf %291, %296 : vector<1x16xf32>
    %c5_i32_144 = arith.constant 5 : i32
    %298 = arith.addi %0, %c5_i32_144 : i32
    %299 = arith.index_cast %298 : i32 to index
    %c6_145 = arith.constant 6 : index
    %300 = memref.load %arg1[%299, %c6_145] : memref<8x8xi32, #tpu.memory_space<smem>>
    %301 = arith.index_cast %300 : i32 to index
    %c0_146 = arith.constant 0 : index
    %302 = vector.load %arg2[%301, %c0_146] : memref<32x16xf32, #tpu.memory_space<vmem>>, vector<1x16xf32>
    %303 = arith.addf %297, %302 : vector<1x16xf32>
    %c5_i32_147 = arith.constant 5 : i32
    %304 = arith.addi %0, %c5_i32_147 : i32
    %305 = arith.index_cast %304 : i32 to index
    %c7_148 = arith.constant 7 : index
    %306 = memref.load %arg1[%305, %c7_148] : memref<8x8xi32, #tpu.memory_space<smem>>
    %307 = arith.index_cast %306 : i32 to index
    %c0_149 = arith.constant 0 : index
    %308 = vector.load %arg2[%307, %c0_149] : memref<32x16xf32, #tpu.memory_space<vmem>>, vector<1x16xf32>
    %309 = arith.addf %303, %308 : vector<1x16xf32>
    %cst_150 = arith.constant 1.250000e-01 : f32
    %310 = vector.broadcast %cst_150 : f32 to vector<1x16xf32>
    %311 = arith.mulf %309, %310 : vector<1x16xf32>
    %c5_151 = arith.constant 5 : index
    %c0_152 = arith.constant 0 : index
    %312 = vector.load %arg8[%c5_151, %c0_152] : memref<8x16xf32, #tpu.memory_space<vmem>>, vector<1x16xf32>
    tpu.vector_store %arg8[%c5_151, %c0_152], %311 {strides = array<i32>} : memref<8x16xf32, #tpu.memory_space<vmem>>, vector<1x16xf32>,
    %cst_153 = arith.constant 0.000000e+00 : f32
    %313 = vector.broadcast %cst_153 : f32 to vector<1x16xf32>
    %c6_i32 = arith.constant 6 : i32
    %314 = arith.addi %0, %c6_i32 : i32
    %315 = arith.index_cast %314 : i32 to index
    %c0_154 = arith.constant 0 : index
    %316 = memref.load %arg1[%315, %c0_154] : memref<8x8xi32, #tpu.memory_space<smem>>
    %317 = arith.index_cast %316 : i32 to index
    %c0_155 = arith.constant 0 : index
    %318 = vector.load %arg2[%317, %c0_155] : memref<32x16xf32, #tpu.memory_space<vmem>>, vector<1x16xf32>
    %319 = arith.addf %313, %318 : vector<1x16xf32>
    %c6_i32_156 = arith.constant 6 : i32
    %320 = arith.addi %0, %c6_i32_156 : i32
    %321 = arith.index_cast %320 : i32 to index
    %c1_157 = arith.constant 1 : index
    %322 = memref.load %arg1[%321, %c1_157] : memref<8x8xi32, #tpu.memory_space<smem>>
    %323 = arith.index_cast %322 : i32 to index
    %c0_158 = arith.constant 0 : index
    %324 = vector.load %arg2[%323, %c0_158] : memref<32x16xf32, #tpu.memory_space<vmem>>, vector<1x16xf32>
    %325 = arith.addf %319, %324 : vector<1x16xf32>
    %c6_i32_159 = arith.constant 6 : i32
    %326 = arith.addi %0, %c6_i32_159 : i32
    %327 = arith.index_cast %326 : i32 to index
    %c2_160 = arith.constant 2 : index
    %328 = memref.load %arg1[%327, %c2_160] : memref<8x8xi32, #tpu.memory_space<smem>>
    %329 = arith.index_cast %328 : i32 to index
    %c0_161 = arith.constant 0 : index
    %330 = vector.load %arg2[%329, %c0_161] : memref<32x16xf32, #tpu.memory_space<vmem>>, vector<1x16xf32>
    %331 = arith.addf %325, %330 : vector<1x16xf32>
    %c6_i32_162 = arith.constant 6 : i32
    %332 = arith.addi %0, %c6_i32_162 : i32
    %333 = arith.index_cast %332 : i32 to index
    %c3_163 = arith.constant 3 : index
    %334 = memref.load %arg1[%333, %c3_163] : memref<8x8xi32, #tpu.memory_space<smem>>
    %335 = arith.index_cast %334 : i32 to index
    %c0_164 = arith.constant 0 : index
    %336 = vector.load %arg2[%335, %c0_164] : memref<32x16xf32, #tpu.memory_space<vmem>>, vector<1x16xf32>
    %337 = arith.addf %331, %336 : vector<1x16xf32>
    %c6_i32_165 = arith.constant 6 : i32
    %338 = arith.addi %0, %c6_i32_165 : i32
    %339 = arith.index_cast %338 : i32 to index
    %c4_166 = arith.constant 4 : index
    %340 = memref.load %arg1[%339, %c4_166] : memref<8x8xi32, #tpu.memory_space<smem>>
    %341 = arith.index_cast %340 : i32 to index
    %c0_167 = arith.constant 0 : index
    %342 = vector.load %arg2[%341, %c0_167] : memref<32x16xf32, #tpu.memory_space<vmem>>, vector<1x16xf32>
    %343 = arith.addf %337, %342 : vector<1x16xf32>
    %c6_i32_168 = arith.constant 6 : i32
    %344 = arith.addi %0, %c6_i32_168 : i32
    %345 = arith.index_cast %344 : i32 to index
    %c5_169 = arith.constant 5 : index
    %346 = memref.load %arg1[%345, %c5_169] : memref<8x8xi32, #tpu.memory_space<smem>>
    %347 = arith.index_cast %346 : i32 to index
    %c0_170 = arith.constant 0 : index
    %348 = vector.load %arg2[%347, %c0_170] : memref<32x16xf32, #tpu.memory_space<vmem>>, vector<1x16xf32>
    %349 = arith.addf %343, %348 : vector<1x16xf32>
    %c6_i32_171 = arith.constant 6 : i32
    %350 = arith.addi %0, %c6_i32_171 : i32
    %351 = arith.index_cast %350 : i32 to index
    %c6_172 = arith.constant 6 : index
    %352 = memref.load %arg1[%351, %c6_172] : memref<8x8xi32, #tpu.memory_space<smem>>
    %353 = arith.index_cast %352 : i32 to index
    %c0_173 = arith.constant 0 : index
    %354 = vector.load %arg2[%353, %c0_173] : memref<32x16xf32, #tpu.memory_space<vmem>>, vector<1x16xf32>
    %355 = arith.addf %349, %354 : vector<1x16xf32>
    %c6_i32_174 = arith.constant 6 : i32
    %356 = arith.addi %0, %c6_i32_174 : i32
    %357 = arith.index_cast %356 : i32 to index
    %c7_175 = arith.constant 7 : index
    %358 = memref.load %arg1[%357, %c7_175] : memref<8x8xi32, #tpu.memory_space<smem>>
    %359 = arith.index_cast %358 : i32 to index
    %c0_176 = arith.constant 0 : index
    %360 = vector.load %arg2[%359, %c0_176] : memref<32x16xf32, #tpu.memory_space<vmem>>, vector<1x16xf32>
    %361 = arith.addf %355, %360 : vector<1x16xf32>
    %cst_177 = arith.constant 1.250000e-01 : f32
    %362 = vector.broadcast %cst_177 : f32 to vector<1x16xf32>
    %363 = arith.mulf %361, %362 : vector<1x16xf32>
    %c6_178 = arith.constant 6 : index
    %c0_179 = arith.constant 0 : index
    %364 = vector.load %arg8[%c6_178, %c0_179] : memref<8x16xf32, #tpu.memory_space<vmem>>, vector<1x16xf32>
    tpu.vector_store %arg8[%c6_178, %c0_179], %363 {strides = array<i32>} : memref<8x16xf32, #tpu.memory_space<vmem>>, vector<1x16xf32>,
    %cst_180 = arith.constant 0.000000e+00 : f32
    %365 = vector.broadcast %cst_180 : f32 to vector<1x16xf32>
    %c7_i32 = arith.constant 7 : i32
    %366 = arith.addi %0, %c7_i32 : i32
    %367 = arith.index_cast %366 : i32 to index
    %c0_181 = arith.constant 0 : index
    %368 = memref.load %arg1[%367, %c0_181] : memref<8x8xi32, #tpu.memory_space<smem>>
    %369 = arith.index_cast %368 : i32 to index
    %c0_182 = arith.constant 0 : index
    %370 = vector.load %arg2[%369, %c0_182] : memref<32x16xf32, #tpu.memory_space<vmem>>, vector<1x16xf32>
    %371 = arith.addf %365, %370 : vector<1x16xf32>
    %c7_i32_183 = arith.constant 7 : i32
    %372 = arith.addi %0, %c7_i32_183 : i32
    %373 = arith.index_cast %372 : i32 to index
    %c1_184 = arith.constant 1 : index
    %374 = memref.load %arg1[%373, %c1_184] : memref<8x8xi32, #tpu.memory_space<smem>>
    %375 = arith.index_cast %374 : i32 to index
    %c0_185 = arith.constant 0 : index
    %376 = vector.load %arg2[%375, %c0_185] : memref<32x16xf32, #tpu.memory_space<vmem>>, vector<1x16xf32>
    %377 = arith.addf %371, %376 : vector<1x16xf32>
    %c7_i32_186 = arith.constant 7 : i32
    %378 = arith.addi %0, %c7_i32_186 : i32
    %379 = arith.index_cast %378 : i32 to index
    %c2_187 = arith.constant 2 : index
    %380 = memref.load %arg1[%379, %c2_187] : memref<8x8xi32, #tpu.memory_space<smem>>
    %381 = arith.index_cast %380 : i32 to index
    %c0_188 = arith.constant 0 : index
    %382 = vector.load %arg2[%381, %c0_188] : memref<32x16xf32, #tpu.memory_space<vmem>>, vector<1x16xf32>
    %383 = arith.addf %377, %382 : vector<1x16xf32>
    %c7_i32_189 = arith.constant 7 : i32
    %384 = arith.addi %0, %c7_i32_189 : i32
    %385 = arith.index_cast %384 : i32 to index
    %c3_190 = arith.constant 3 : index
    %386 = memref.load %arg1[%385, %c3_190] : memref<8x8xi32, #tpu.memory_space<smem>>
    %387 = arith.index_cast %386 : i32 to index
    %c0_191 = arith.constant 0 : index
    %388 = vector.load %arg2[%387, %c0_191] : memref<32x16xf32, #tpu.memory_space<vmem>>, vector<1x16xf32>
    %389 = arith.addf %383, %388 : vector<1x16xf32>
    %c7_i32_192 = arith.constant 7 : i32
    %390 = arith.addi %0, %c7_i32_192 : i32
    %391 = arith.index_cast %390 : i32 to index
    %c4_193 = arith.constant 4 : index
    %392 = memref.load %arg1[%391, %c4_193] : memref<8x8xi32, #tpu.memory_space<smem>>
    %393 = arith.index_cast %392 : i32 to index
    %c0_194 = arith.constant 0 : index
    %394 = vector.load %arg2[%393, %c0_194] : memref<32x16xf32, #tpu.memory_space<vmem>>, vector<1x16xf32>
    %395 = arith.addf %389, %394 : vector<1x16xf32>
    %c7_i32_195 = arith.constant 7 : i32
    %396 = arith.addi %0, %c7_i32_195 : i32
    %397 = arith.index_cast %396 : i32 to index
    %c5_196 = arith.constant 5 : index
    %398 = memref.load %arg1[%397, %c5_196] : memref<8x8xi32, #tpu.memory_space<smem>>
    %399 = arith.index_cast %398 : i32 to index
    %c0_197 = arith.constant 0 : index
    %400 = vector.load %arg2[%399, %c0_197] : memref<32x16xf32, #tpu.memory_space<vmem>>, vector<1x16xf32>
    %401 = arith.addf %395, %400 : vector<1x16xf32>
    %c7_i32_198 = arith.constant 7 : i32
    %402 = arith.addi %0, %c7_i32_198 : i32
    %403 = arith.index_cast %402 : i32 to index
    %c6_199 = arith.constant 6 : index
    %404 = memref.load %arg1[%403, %c6_199] : memref<8x8xi32, #tpu.memory_space<smem>>
    %405 = arith.index_cast %404 : i32 to index
    %c0_200 = arith.constant 0 : index
    %406 = vector.load %arg2[%405, %c0_200] : memref<32x16xf32, #tpu.memory_space<vmem>>, vector<1x16xf32>
    %407 = arith.addf %401, %406 : vector<1x16xf32>
    %c7_i32_201 = arith.constant 7 : i32
    %408 = arith.addi %0, %c7_i32_201 : i32
    %409 = arith.index_cast %408 : i32 to index
    %c7_202 = arith.constant 7 : index
    %410 = memref.load %arg1[%409, %c7_202] : memref<8x8xi32, #tpu.memory_space<smem>>
    %411 = arith.index_cast %410 : i32 to index
    %c0_203 = arith.constant 0 : index
    %412 = vector.load %arg2[%411, %c0_203] : memref<32x16xf32, #tpu.memory_space<vmem>>, vector<1x16xf32>
    %413 = arith.addf %407, %412 : vector<1x16xf32>
    %cst_204 = arith.constant 1.250000e-01 : f32
    %414 = vector.broadcast %cst_204 : f32 to vector<1x16xf32>
    %415 = arith.mulf %413, %414 : vector<1x16xf32>
    %c7_205 = arith.constant 7 : index
    %c0_206 = arith.constant 0 : index
    %416 = vector.load %arg8[%c7_205, %c0_206] : memref<8x16xf32, #tpu.memory_space<vmem>>, vector<1x16xf32>
    tpu.vector_store %arg8[%c7_205, %c0_206], %415 {strides = array<i32>} : memref<8x16xf32, #tpu.memory_space<vmem>>, vector<1x16xf32>,
    %c0_207 = arith.constant 0 : index
    %c0_208 = arith.constant 0 : index
    %417 = vector.load %arg8[%c0_207, %c0_208] : memref<8x16xf32, #tpu.memory_space<vmem>>, vector<8x16xf32>
    %c0_209 = arith.constant 0 : index
    %c0_210 = arith.constant 0 : index
    %418 = vector.load %arg3[%c0_209, %c0_210] : memref<16x32xf32, #tpu.memory_space<vmem>>, vector<16x32xf32>
    %cst_211 = arith.constant dense<0.000000e+00> : vector<8x32xf32>
    %419 = tpu.matmul %417, %418, %cst_211 {dimension_numbers = #tpu.dot_dimension_numbers<[1], [0], [0], [1], [0, 0, 1, 1], [], []>} : vector<8x16xf32>, vector<16x32xf32>, vector<8x32xf32> -> vector<8x32xf32>
    %c0_212 = arith.constant 0 : index
    %c0_213 = arith.constant 0 : index
    %420 = vector.load %arg4[%c0_212, %c0_213] : memref<1x32xf32, #tpu.memory_space<vmem>>, vector<1x32xf32>
    %421 = vector.broadcast %420 : vector<1x32xf32> to vector<8x32xf32>
    %422 = arith.addf %419, %421 : vector<8x32xf32>
    %cst_214 = arith.constant 0.000000e+00 : f32
    %423 = vector.broadcast %cst_214 : f32 to vector<8x32xf32>
    %424 = arith.maximumf %422, %423 : vector<8x32xf32>
    %c0_215 = arith.constant 0 : index
    %c0_216 = arith.constant 0 : index
    %425 = vector.load %arg5[%c0_215, %c0_216] : memref<32x128xf32, #tpu.memory_space<vmem>>, vector<32x128xf32>
    %cst_217 = arith.constant dense<0.000000e+00> : vector<8x128xf32>
    %426 = tpu.matmul %424, %425, %cst_217 {dimension_numbers = #tpu.dot_dimension_numbers<[1], [0], [0], [1], [0, 0, 1, 1], [], []>} : vector<8x32xf32>, vector<32x128xf32>, vector<8x128xf32> -> vector<8x128xf32>
    %c0_218 = arith.constant 0 : index
    %c0_219 = arith.constant 0 : index
    %427 = vector.load %arg6[%c0_218, %c0_219] : memref<1x128xf32, #tpu.memory_space<vmem>>, vector<1x128xf32>
    %428 = vector.broadcast %427 : vector<1x128xf32> to vector<8x128xf32>
    %429 = arith.addf %426, %428 : vector<8x128xf32>
    %430 = arith.negf %429 : vector<8x128xf32>
    %431 = math.exp %430 : vector<8x128xf32>
    %cst_220 = arith.constant 1.000000e+00 : f32
    %432 = vector.broadcast %cst_220 : f32 to vector<8x128xf32>
    %433 = arith.addf %432, %431 : vector<8x128xf32>
    %434 = arith.divf %432, %433 : vector<8x128xf32>
    %c0_221 = arith.constant 0 : index
    %c0_222 = arith.constant 0 : index
    %435 = vector.load %arg7[%c0_221, %c0_222] : memref<8x128xf32, #tpu.memory_space<vmem>>, vector<8x128xf32>
    tpu.vector_store %arg7[%c0_221, %c0_222], %434 {strides = array<i32>} : memref<8x128xf32, #tpu.memory_space<vmem>>, vector<8x128xf32>,
    return
  }
  func.func @transform_0(%arg0: i32, %arg1: memref<8x8xi32, #tpu.memory_space<smem>>) -> (i32, i32) {
    %c0_i32 = arith.constant 0 : i32
    %c0_i32_0 = arith.constant 0 : i32
    %c0_i32_1 = arith.constant 0 : i32
    return %c0_i32, %c0_i32_0 : i32, i32
  }
  func.func @transform_1(%arg0: i32, %arg1: memref<8x8xi32, #tpu.memory_space<smem>>) -> (i32, i32) {
    %c0_i32 = arith.constant 0 : i32
    %c0_i32_0 = arith.constant 0 : i32
    %c0_i32_1 = arith.constant 0 : i32
    return %c0_i32, %c0_i32_0 : i32, i32
  }
  func.func @transform_2(%arg0: i32, %arg1: memref<8x8xi32, #tpu.memory_space<smem>>) -> (i32, i32) {
    %c0_i32 = arith.constant 0 : i32
    %c0_i32_0 = arith.constant 0 : i32
    %c0_i32_1 = arith.constant 0 : i32
    return %c0_i32, %c0_i32_0 : i32, i32
  }
  func.func @transform_3(%arg0: i32, %arg1: memref<8x8xi32, #tpu.memory_space<smem>>) -> (i32, i32) {
    %c0_i32 = arith.constant 0 : i32
    %c0_i32_0 = arith.constant 0 : i32
    %c0_i32_1 = arith.constant 0 : i32
    return %c0_i32, %c0_i32_0 : i32, i32
  }
  func.func @transform_4(%arg0: i32, %arg1: memref<8x8xi32, #tpu.memory_space<smem>>) -> (i32, i32) {
    %c0_i32 = arith.constant 0 : i32
    %c0_i32_0 = arith.constant 0 : i32
    %c0_i32_1 = arith.constant 0 : i32
    return %c0_i32, %c0_i32_0 : i32, i32
  }
  func.func @transform_5(%arg0: i32, %arg1: memref<8x8xi32, #tpu.memory_space<smem>>) -> (i32, i32) {
    %c0_i32 = arith.constant 0 : i32
    %c0_i32_0 = arith.constant 0 : i32
    return %arg0, %c0_i32 : i32, i32
  }
}

</mosaic_0001>

<llo_original>
// kernel: tpu_custom_call.1
$region0: #{tpu_custom_call.1}
  #allocation0 [shape = 'u32[]', space=smem, size = 0x4, offset = 0x4, fixed_abs, tag = 'smem constant byte address 0x4 - core index']
  #allocation1 [shape = 'u32[144,128]{1,0:T(1,128)}', space=vmem, size = 0x12000, scoped, tag = 'internal scratch']
  #allocation2 [shape = 'f32[8,16]{1,0:T(8,128)}', space=vmem, size = 0x1000, scoped, tag = 'scratch operand']
  #allocation3 [shape = 's32[1]{0}', space=sflag, size = 0x4, scoped, tag = 'scoped memory for tpu_custom_call.1']
  #allocation4 [shape = 'u8[4096]{0}', space=smem, size = 0x1000, scoped, tag = 'prefetched SMEM operand 0']
  %s0 = inlined_call_operand.vmem [shape: s32[8,8], index: 0, kind: input, shape index: {}]
  %s1 = inlined_call_operand.vmem [shape: f32[32,16], index: 1, kind: input, shape index: {}]
  %s2 = inlined_call_operand.vmem [shape: f32[16,32], index: 2, kind: input, shape index: {}]
  %s3 = inlined_call_operand.vmem [shape: f32[1,32], index: 3, kind: input, shape index: {}]
  %s4 = inlined_call_operand.vmem [shape: f32[32,128], index: 4, kind: input, shape index: {}]
  %s5 = inlined_call_operand.vmem [shape: f32[1,128], index: 5, kind: input, shape index: {}]
  %s6 = inlined_call_operand.hbm [shape: f32[8,128], index: 6, kind: output, shape index: {}]
  %s7 = sld [smem:[#allocation0]]
  $region30: #{tpu_custom_call.1} parent=0
    _
  %s9 = ssub.s32 1, %s7
  %s10 = scalar_select 0, %s9, %s7
  %s11 = sshll.u32 %s0, 4
  %s12 = int_to_ptr.vmem [resolvable:$true] %s11
  %14 = dma.vmem_to_smem %s12, 128, [#allocation4], [#allocation3]
  %15 = dma.done [#allocation3], 128
  %16 = sfence
  $region1: #{tpu_custom_call.1} parent=0
    #allocation5 [shape = 'u8[4096]{0}', space=vmem, size = 0x1000, scoped, tag = 'output window, operand 0, single buffered']
    #allocation6 [shape = 's32[1]{0}', space=sflag, size = 0x4, scoped, tag = 'scoped memory for tpu_custom_call.1']
    %17 = vsyncpa [#allocation6], 0
    // Predicated region
    $region2: #{tpu_custom_call.1} parent=1 // pred_check
      _
    $region3: #{tpu_custom_call.1} parent=1 // pred_check_branch
      %19 = sbr.rel (0) target = $region5
    $region4: #{tpu_custom_call.1} parent=1 // pred_region
      _
    $region5: #{tpu_custom_call.1} parent=1 // pred_fallthru
      _
    // Predicated region
    $region6: #{tpu_custom_call.1} parent=1 // pred_check
      _
    $region7: #{tpu_custom_call.1} parent=1 // pred_check_branch
      %21 = sbr.rel (0) target = $region9
    $region8: #{tpu_custom_call.1} parent=1 // pred_region
      _
    $region9: #{tpu_custom_call.1} parent=1 // pred_fallthru
      _
    // Predicated region
    $region10: #{tpu_custom_call.1} parent=1 // pred_check
      _
    $region11: #{tpu_custom_call.1} parent=1 // pred_check_branch
      %23 = sbr.rel (0) target = $region13
    $region12: #{tpu_custom_call.1} parent=1 // pred_region
      _
    $region13: #{tpu_custom_call.1} parent=1 // pred_fallthru
      _
    // Predicated region
    $region14: #{tpu_custom_call.1} parent=1 // pred_check
      _
    $region15: #{tpu_custom_call.1} parent=1 // pred_check_branch
      %25 = sbr.rel (0) target = $region17
    $region16: #{tpu_custom_call.1} parent=1 // pred_region
      _
    $region17: #{tpu_custom_call.1} parent=1 // pred_fallthru
      _
    // Predicated region
    $region18: #{tpu_custom_call.1} parent=1 // pred_check
      _
    $region19: #{tpu_custom_call.1} parent=1 // pred_check_branch
      %27 = sbr.rel (0) target = $region21
    $region20: #{tpu_custom_call.1} parent=1 // pred_region
      _
    $region21: #{tpu_custom_call.1} parent=1 // pred_fallthru
      _
    %s28 = smul.u32 0, 8
    %s29 = smul.u32 %s28, 128
    %s30 = sld [smem:[#allocation4 + %s29]]
    %s31 = scalar_lea.vmem %s1, %s30
    %v32 = vld [vmem:[%s31] sm:$0x1]
    %v33 = vadd.f32 %v32, 0.0
    %s34 = sadd.s32 %s29, 1
    %s35 = sld [smem:[#allocation4 + %s34]]
    %s36 = scalar_lea.vmem %s1, %s35
    %v37 = vld [vmem:[%s36] sm:$0x1]
    %v38 = vadd.f32 %v33, %v37
    %s39 = sadd.s32 %s29, 2
    %s40 = sld [smem:[#allocation4 + %s39]]
    %s41 = scalar_lea.vmem %s1, %s40
    %v42 = vld [vmem:[%s41] sm:$0x1]
    %v43 = vadd.f32 %v38, %v42
    %s44 = sadd.s32 %s29, 3
    %s45 = sld [smem:[#allocation4 + %s44]]
    %s46 = scalar_lea.vmem %s1, %s45
    %v47 = vld [vmem:[%s46] sm:$0x1]
    %v48 = vadd.f32 %v43, %v47
    %s49 = sadd.s32 %s29, 4
    %s50 = sld [smem:[#allocation4 + %s49]]
    %s51 = scalar_lea.vmem %s1, %s50
    %v52 = vld [vmem:[%s51] sm:$0x1]
    %v53 = vadd.f32 %v48, %v52
    %s54 = sadd.s32 %s29, 5
    %s55 = sld [smem:[#allocation4 + %s54]]
    %s56 = scalar_lea.vmem %s1, %s55
    %v57 = vld [vmem:[%s56] sm:$0x1]
    %v58 = vadd.f32 %v53, %v57
    %s59 = sadd.s32 %s29, 6
    %s60 = sld [smem:[#allocation4 + %s59]]
    %s61 = scalar_lea.vmem %s1, %s60
    %v62 = vld [vmem:[%s61] sm:$0x1]
    %v63 = vadd.f32 %v58, %v62
    %s64 = sadd.s32 %s29, 7
    %s65 = sld [smem:[#allocation4 + %s64]]
    %s66 = scalar_lea.vmem %s1, %s65
    %v67 = vld [vmem:[%s66] sm:$0x1]
    %v68 = vadd.f32 %v63, %v67
    %v69 = vmul.f32 %v68, 0.125
    %vm70 = vcmask 122880
    %71 = vst.msk [vmem:[#allocation2] sm:$0x1] %vm70, %v69
    %s72 = sadd.s32 %s28, 1
    %s73 = smul.u32 %s72, 128
    %s74 = sld [smem:[#allocation4 + %s73]]
    %s75 = scalar_lea.vmem %s1, %s74
    %v76 = vld [vmem:[%s75] sm:$0x1]
    %v77 = vadd.f32 %v76, 0.0
    %s78 = sadd.s32 %s73, 1
    %s79 = sld [smem:[#allocation4 + %s78]]
    %s80 = scalar_lea.vmem %s1, %s79
    %v81 = vld [vmem:[%s80] sm:$0x1]
    %v82 = vadd.f32 %v77, %v81
    %s83 = sadd.s32 %s73, 2
    %s84 = sld [smem:[#allocation4 + %s83]]
    %s85 = scalar_lea.vmem %s1, %s84
    %v86 = vld [vmem:[%s85] sm:$0x1]
    %v87 = vadd.f32 %v82, %v86
    %s88 = sadd.s32 %s73, 3
    %s89 = sld [smem:[#allocation4 + %s88]]
    %s90 = scalar_lea.vmem %s1, %s89
    %v91 = vld [vmem:[%s90] sm:$0x1]
    %v92 = vadd.f32 %v87, %v91
    %s93 = sadd.s32 %s73, 4
    %s94 = sld [smem:[#allocation4 + %s93]]
    %s95 = scalar_lea.vmem %s1, %s94
    %v96 = vld [vmem:[%s95] sm:$0x1]
    %v97 = vadd.f32 %v92, %v96
    %s98 = sadd.s32 %s73, 5
    %s99 = sld [smem:[#allocation4 + %s98]]
    %s100 = scalar_lea.vmem %s1, %s99
    %v101 = vld [vmem:[%s100] sm:$0x1]
    %v102 = vadd.f32 %v97, %v101
    %s103 = sadd.s32 %s73, 6
    %s104 = sld [smem:[#allocation4 + %s103]]
    %s105 = scalar_lea.vmem %s1, %s104
    %v106 = vld [vmem:[%s105] sm:$0x1]
    %v107 = vadd.f32 %v102, %v106
    %s108 = sadd.s32 %s73, 7
    %s109 = sld [smem:[#allocation4 + %s108]]
    %s110 = scalar_lea.vmem %s1, %s109
    %v111 = vld [vmem:[%s110] sm:$0x1]
    %v112 = vadd.f32 %v107, %v111
    %v113 = vmul.f32 %v112, 0.125
    %114 = vst.msk [vmem:[#allocation2 + $0x1] sm:$0x1] %vm70, %v113
    %s115 = sadd.s32 %s28, 2
    %s116 = smul.u32 %s115, 128
    %s117 = sld [smem:[#allocation4 + %s116]]
    %s118 = scalar_lea.vmem %s1, %s117
    %v119 = vld [vmem:[%s118] sm:$0x1]
    %v120 = vadd.f32 %v119, 0.0
    %s121 = sadd.s32 %s116, 1
    %s122 = sld [smem:[#allocation4 + %s121]]
    %s123 = scalar_lea.vmem %s1, %s122
    %v124 = vld [vmem:[%s123] sm:$0x1]
    %v125 = vadd.f32 %v120, %v124
    %s126 = sadd.s32 %s116, 2
    %s127 = sld [smem:[#allocation4 + %s126]]
    %s128 = scalar_lea.vmem %s1, %s127
    %v129 = vld [vmem:[%s128] sm:$0x1]
    %v130 = vadd.f32 %v125, %v129
    %s131 = sadd.s32 %s116, 3
    %s132 = sld [smem:[#allocation4 + %s131]]
    %s133 = scalar_lea.vmem %s1, %s132
    %v134 = vld [vmem:[%s133] sm:$0x1]
    %v135 = vadd.f32 %v130, %v134
    %s136 = sadd.s32 %s116, 4
    %s137 = sld [smem:[#allocation4 + %s136]]
    %s138 = scalar_lea.vmem %s1, %s137
    %v139 = vld [vmem:[%s138] sm:$0x1]
    %v140 = vadd.f32 %v135, %v139
    %s141 = sadd.s32 %s116, 5
    %s142 = sld [smem:[#allocation4 + %s141]]
    %s143 = scalar_lea.vmem %s1, %s142
    %v144 = vld [vmem:[%s143] sm:$0x1]
    %v145 = vadd.f32 %v140, %v144
    %s146 = sadd.s32 %s116, 6
    %s147 = sld [smem:[#allocation4 + %s146]]
    %s148 = scalar_lea.vmem %s1, %s147
    %v149 = vld [vmem:[%s148] sm:$0x1]
    %v150 = vadd.f32 %v145, %v149
    %s151 = sadd.s32 %s116, 7
    %s152 = sld [smem:[#allocation4 + %s151]]
    %s153 = scalar_lea.vmem %s1, %s152
    %v154 = vld [vmem:[%s153] sm:$0x1]
    %v155 = vadd.f32 %v150, %v154
    %v156 = vmul.f32 %v155, 0.125
    %157 = vst.msk [vmem:[#allocation2 + $0x2] sm:$0x1] %vm70, %v156
    %s158 = sadd.s32 %s28, 3
    %s159 = smul.u32 %s158, 128
    %s160 = sld [smem:[#allocation4 + %s159]]
    %s161 = scalar_lea.vmem %s1, %s160
    %v162 = vld [vmem:[%s161] sm:$0x1]
    %v163 = vadd.f32 %v162, 0.0
    %s164 = sadd.s32 %s159, 1
    %s165 = sld [smem:[#allocation4 + %s164]]
    %s166 = scalar_lea.vmem %s1, %s165
    %v167 = vld [vmem:[%s166] sm:$0x1]
    %v168 = vadd.f32 %v163, %v167
    %s169 = sadd.s32 %s159, 2
    %s170 = sld [smem:[#allocation4 + %s169]]
    %s171 = scalar_lea.vmem %s1, %s170
    %v172 = vld [vmem:[%s171] sm:$0x1]
    %v173 = vadd.f32 %v168, %v172
    %s174 = sadd.s32 %s159, 3
    %s175 = sld [smem:[#allocation4 + %s174]]
    %s176 = scalar_lea.vmem %s1, %s175
    %v177 = vld [vmem:[%s176] sm:$0x1]
    %v178 = vadd.f32 %v173, %v177
    %s179 = sadd.s32 %s159, 4
    %s180 = sld [smem:[#allocation4 + %s179]]
    %s181 = scalar_lea.vmem %s1, %s180
    %v182 = vld [vmem:[%s181] sm:$0x1]
    %v183 = vadd.f32 %v178, %v182
    %s184 = sadd.s32 %s159, 5
    %s185 = sld [smem:[#allocation4 + %s184]]
    %s186 = scalar_lea.vmem %s1, %s185
    %v187 = vld [vmem:[%s186] sm:$0x1]
    %v188 = vadd.f32 %v183, %v187
    %s189 = sadd.s32 %s159, 6
    %s190 = sld [smem:[#allocation4 + %s189]]
    %s191 = scalar_lea.vmem %s1, %s190
    %v192 = vld [vmem:[%s191] sm:$0x1]
    %v193 = vadd.f32 %v188, %v192
    %s194 = sadd.s32 %s159, 7
    %s195 = sld [smem:[#allocation4 + %s194]]
    %s196 = scalar_lea.vmem %s1, %s195
    %v197 = vld [vmem:[%s196] sm:$0x1]
    %v198 = vadd.f32 %v193, %v197
    %v199 = vmul.f32 %v198, 0.125
    %200 = vst.msk [vmem:[#allocation2 + $0x3] sm:$0x1] %vm70, %v199
    %s201 = sadd.s32 %s28, 4
    %s202 = smul.u32 %s201, 128
    %s203 = sld [smem:[#allocation4 + %s202]]
    %s204 = scalar_lea.vmem %s1, %s203
    %v205 = vld [vmem:[%s204] sm:$0x1]
    %v206 = vadd.f32 %v205, 0.0
    %s207 = sadd.s32 %s202, 1
    %s208 = sld [smem:[#allocation4 + %s207]]
    %s209 = scalar_lea.vmem %s1, %s208
    %v210 = vld [vmem:[%s209] sm:$0x1]
    %v211 = vadd.f32 %v206, %v210
    %s212 = sadd.s32 %s202, 2
    %s213 = sld [smem:[#allocation4 + %s212]]
    %s214 = scalar_lea.vmem %s1, %s213
    %v215 = vld [vmem:[%s214] sm:$0x1]
    %v216 = vadd.f32 %v211, %v215
    %s217 = sadd.s32 %s202, 3
    %s218 = sld [smem:[#allocation4 + %s217]]
    %s219 = scalar_lea.vmem %s1, %s218
    %v220 = vld [vmem:[%s219] sm:$0x1]
    %v221 = vadd.f32 %v216, %v220
    %s222 = sadd.s32 %s202, 4
    %s223 = sld [smem:[#allocation4 + %s222]]
    %s224 = scalar_lea.vmem %s1, %s223
    %v225 = vld [vmem:[%s224] sm:$0x1]
    %v226 = vadd.f32 %v221, %v225
    %s227 = sadd.s32 %s202, 5
    %s228 = sld [smem:[#allocation4 + %s227]]
    %s229 = scalar_lea.vmem %s1, %s228
    %v230 = vld [vmem:[%s229] sm:$0x1]
    %v231 = vadd.f32 %v226, %v230
    %s232 = sadd.s32 %s202, 6
    %s233 = sld [smem:[#allocation4 + %s232]]
    %s234 = scalar_lea.vmem %s1, %s233
    %v235 = vld [vmem:[%s234] sm:$0x1]
    %v236 = vadd.f32 %v231, %v235
    %s237 = sadd.s32 %s202, 7
    %s238 = sld [smem:[#allocation4 + %s237]]
    %s239 = scalar_lea.vmem %s1, %s238
    %v240 = vld [vmem:[%s239] sm:$0x1]
    %v241 = vadd.f32 %v236, %v240
    %v242 = vmul.f32 %v241, 0.125
    %243 = vst.msk [vmem:[#allocation2 + $0x4] sm:$0x1] %vm70, %v242
    %s244 = sadd.s32 %s28, 5
    %s245 = smul.u32 %s244, 128
    %s246 = sld [smem:[#allocation4 + %s245]]
    %s247 = scalar_lea.vmem %s1, %s246
    %v248 = vld [vmem:[%s247] sm:$0x1]
    %v249 = vadd.f32 %v248, 0.0
    %s250 = sadd.s32 %s245, 1
    %s251 = sld [smem:[#allocation4 + %s250]]
    %s252 = scalar_lea.vmem %s1, %s251
    %v253 = vld [vmem:[%s252] sm:$0x1]
    %v254 = vadd.f32 %v249, %v253
    %s255 = sadd.s32 %s245, 2
    %s256 = sld [smem:[#allocation4 + %s255]]
    %s257 = scalar_lea.vmem %s1, %s256
    %v258 = vld [vmem:[%s257] sm:$0x1]
    %v259 = vadd.f32 %v254, %v258
    %s260 = sadd.s32 %s245, 3
    %s261 = sld [smem:[#allocation4 + %s260]]
    %s262 = scalar_lea.vmem %s1, %s261
    %v263 = vld [vmem:[%s262] sm:$0x1]
    %v264 = vadd.f32 %v259, %v263
    %s265 = sadd.s32 %s245, 4
    %s266 = sld [smem:[#allocation4 + %s265]]
    %s267 = scalar_lea.vmem %s1, %s266
    %v268 = vld [vmem:[%s267] sm:$0x1]
    %v269 = vadd.f32 %v264, %v268
    %s270 = sadd.s32 %s245, 5
    %s271 = sld [smem:[#allocation4 + %s270]]
    %s272 = scalar_lea.vmem %s1, %s271
    %v273 = vld [vmem:[%s272] sm:$0x1]
    %v274 = vadd.f32 %v269, %v273
    %s275 = sadd.s32 %s245, 6
    %s276 = sld [smem:[#allocation4 + %s275]]
    %s277 = scalar_lea.vmem %s1, %s276
    %v278 = vld [vmem:[%s277] sm:$0x1]
    %v279 = vadd.f32 %v274, %v278
    %s280 = sadd.s32 %s245, 7
    %s281 = sld [smem:[#allocation4 + %s280]]
    %s282 = scalar_lea.vmem %s1, %s281
    %v283 = vld [vmem:[%s282] sm:$0x1]
    %v284 = vadd.f32 %v279, %v283
    %v285 = vmul.f32 %v284, 0.125
    %286 = vst.msk [vmem:[#allocation2 + $0x5] sm:$0x1] %vm70, %v285
    %s287 = sadd.s32 %s28, 6
    %s288 = smul.u32 %s287, 128
    %s289 = sld [smem:[#allocation4 + %s288]]
    %s290 = scalar_lea.vmem %s1, %s289
    %v291 = vld [vmem:[%s290] sm:$0x1]
    %v292 = vadd.f32 %v291, 0.0
    %s293 = sadd.s32 %s288, 1
    %s294 = sld [smem:[#allocation4 + %s293]]
    %s295 = scalar_lea.vmem %s1, %s294
    %v296 = vld [vmem:[%s295] sm:$0x1]
    %v297 = vadd.f32 %v292, %v296
    %s298 = sadd.s32 %s288, 2
    %s299 = sld [smem:[#allocation4 + %s298]]
    %s300 = scalar_lea.vmem %s1, %s299
    %v301 = vld [vmem:[%s300] sm:$0x1]
    %v302 = vadd.f32 %v297, %v301
    %s303 = sadd.s32 %s288, 3
    %s304 = sld [smem:[#allocation4 + %s303]]
    %s305 = scalar_lea.vmem %s1, %s304
    %v306 = vld [vmem:[%s305] sm:$0x1]
    %v307 = vadd.f32 %v302, %v306
    %s308 = sadd.s32 %s288, 4
    %s309 = sld [smem:[#allocation4 + %s308]]
    %s310 = scalar_lea.vmem %s1, %s309
    %v311 = vld [vmem:[%s310] sm:$0x1]
    %v312 = vadd.f32 %v307, %v311
    %s313 = sadd.s32 %s288, 5
    %s314 = sld [smem:[#allocation4 + %s313]]
    %s315 = scalar_lea.vmem %s1, %s314
    %v316 = vld [vmem:[%s315] sm:$0x1]
    %v317 = vadd.f32 %v312, %v316
    %s318 = sadd.s32 %s288, 6
    %s319 = sld [smem:[#allocation4 + %s318]]
    %s320 = scalar_lea.vmem %s1, %s319
    %v321 = vld [vmem:[%s320] sm:$0x1]
    %v322 = vadd.f32 %v317, %v321
    %s323 = sadd.s32 %s288, 7
    %s324 = sld [smem:[#allocation4 + %s323]]
    %s325 = scalar_lea.vmem %s1, %s324
    %v326 = vld [vmem:[%s325] sm:$0x1]
    %v327 = vadd.f32 %v322, %v326
    %v328 = vmul.f32 %v327, 0.125
    %329 = vst.msk [vmem:[#allocation2 + $0x6] sm:$0x1] %vm70, %v328
    %s330 = sadd.s32 %s28, 7
    %s331 = smul.u32 %s330, 128
    %s332 = sld [smem:[#allocation4 + %s331]]
    %s333 = scalar_lea.vmem %s1, %s332
    %v334 = vld [vmem:[%s333] sm:$0x1]
    %v335 = vadd.f32 %v334, 0.0
    %s336 = sadd.s32 %s331, 1
    %s337 = sld [smem:[#allocation4 + %s336]]
    %s338 = scalar_lea.vmem %s1, %s337
    %v339 = vld [vmem:[%s338] sm:$0x1]
    %v340 = vadd.f32 %v335, %v339
    %s341 = sadd.s32 %s331, 2
    %s342 = sld [smem:[#allocation4 + %s341]]
    %s343 = scalar_lea.vmem %s1, %s342
    %v344 = vld [vmem:[%s343] sm:$0x1]
    %v345 = vadd.f32 %v340, %v344
    %s346 = sadd.s32 %s331, 3
    %s347 = sld [smem:[#allocation4 + %s346]]
    %s348 = scalar_lea.vmem %s1, %s347
    %v349 = vld [vmem:[%s348] sm:$0x1]
    %v350 = vadd.f32 %v345, %v349
    %s351 = sadd.s32 %s331, 4
    %s352 = sld [smem:[#allocation4 + %s351]]
    %s353 = scalar_lea.vmem %s1, %s352
    %v354 = vld [vmem:[%s353] sm:$0x1]
    %v355 = vadd.f32 %v350, %v354
    %s356 = sadd.s32 %s331, 5
    %s357 = sld [smem:[#allocation4 + %s356]]
    %s358 = scalar_lea.vmem %s1, %s357
    %v359 = vld [vmem:[%s358] sm:$0x1]
    %v360 = vadd.f32 %v355, %v359
    %s361 = sadd.s32 %s331, 6
    %s362 = sld [smem:[#allocation4 + %s361]]
    %s363 = scalar_lea.vmem %s1, %s362
    %v364 = vld [vmem:[%s363] sm:$0x1]
    %v365 = vadd.f32 %v360, %v364
    %s366 = sadd.s32 %s331, 7
    %s367 = sld [smem:[#allocation4 + %s366]]
    %s368 = scalar_lea.vmem %s1, %s367
    %v369 = vld [vmem:[%s368] sm:$0x1]
    %v370 = vadd.f32 %v365, %v369
    %v371 = vmul.f32 %v370, 0.125
    %372 = vst.msk [vmem:[#allocation2 + $0x7] sm:$0x1] %vm70, %v371
    %v373 = vld [vmem:[#allocation2] sm:$0xff]
    %v374 = vld [vmem:[%s2] sm:$0xff]
    %v375 = vld [vmem:[%s2 + $0x8] sm:$0xff]
    %v376 = vld [vmem:[%s3] sm:$0x1]
    %v378 = vlaneseq
    %v379 = vshrl.u32 %v378, 7
    %v380 = vsub.s32 0, %v379
    %v381 = vrot.slane %v376, %v380
    %vm383 = vcmask 130048
    %v385 = vsel %vm383, %v373, 0
    %387 = vmatprep.subr.mxu0 0.0
    %388 = vmatpush1.msra.mxu0 %v374
    %389 = vmatprep.subr.mxu0 0.0
    %390 = vmatpush1.msra.mxu0 %v375
    %391 = vmatprep.subr.mxu0 0.0
    %392 = vmatpush1.msra.mxu0 0.0
    %393 = vmatprep.subr.mxu0 0.0
    %394 = vmatpush1.msra.mxu0 0.0
    %395 = vmatprep.subr.mxu0 0.0
    %396 = vmatpush1.msra.mxu0 0.0
    %397 = vmatprep.subr.mxu0 0.0
    %398 = vmatpush1.msra.mxu0 0.0
    %399 = vmatprep.subr.mxu0 0.0
    %400 = vmatpush1.msra.mxu0 0.0
    %401 = vmatprep.subr.mxu0 0.0
    %402 = vmatpush1.msra.mxu0 0.0
    %403 = vmatprep.subr.mxu0 0.0
    %404 = vmatpush1.msra.mxu0 0.0
    %405 = vmatprep.subr.mxu0 0.0
    %406 = vmatpush1.msra.mxu0 0.0
    %407 = vmatprep.subr.mxu0 0.0
    %408 = vmatpush1.msra.mxu0 0.0
    %409 = vmatprep.subr.mxu0 0.0
    %410 = vmatpush1.msra.mxu0 0.0
    %411 = vmatprep.subr.mxu0 0.0
    %412 = vmatpush1.msra.mxu0 0.0
    %413 = vmatprep.subr.mxu0 0.0
    %414 = vmatpush1.msra.mxu0 0.0
    %415 = vmatprep.subr.mxu0 0.0
    %416 = vmatpush1.msra.mxu0 0.0
    %417 = vmatprep.subr.mxu0 0.0
    %418 = vmatpush1.msra.mxu0 0.0
    %419 = vmatprep.subr.mxu0 0.0
    %420 = vmatpush1.msra.mxu0 0.0
    %421 = vmatprep.subr.mxu0 0.0
    %422 = vmatpush1.msra.mxu0 0.0
    %423 = vmatprep.subr.mxu0 0.0
    %424 = vmatpush1.msra.mxu0 0.0
    %425 = vmatprep.subr.mxu0 0.0
    %426 = vmatpush1.msra.mxu0 0.0
    %427 = vmatprep.subr.mxu0 0.0
    %428 = vmatpush1.msra.mxu0 0.0
    %429 = vmatprep.subr.mxu0 0.0
    %430 = vmatpush1.msra.mxu0 0.0
    %431 = vmatprep.subr.mxu0 0.0
    %432 = vmatpush1.msra.mxu0 0.0
    %433 = vmatprep.subr.mxu0 0.0
    %434 = vmatpush1.msra.mxu0 0.0
    %435 = vmatprep.subr.mxu0 0.0
    %436 = vmatpush1.msra.mxu0 0.0
    %437 = vmatprep.subr.mxu0 0.0
    %438 = vmatpush1.msra.mxu0 0.0
    %439 = vmatprep.subr.mxu0 0.0
    %440 = vmatpush1.msra.mxu0 0.0
    %441 = vmatprep.subr.mxu0 0.0
    %442 = vmatpush1.msra.mxu0 0.0
    %443 = vmatprep.subr.mxu0 0.0
    %444 = vmatpush1.msra.mxu0 0.0
    %445 = vmatprep.subr.mxu0 0.0
    %446 = vmatpush1.msra.mxu0 0.0
    %447 = vmatprep.subr.mxu0 0.0
    %448 = vmatpush1.msra.mxu0 0.0
    %449 = vmatprep.subr.mxu0 0.0
    %450 = vmatpush1.msra.mxu0 0.0
    %451 = vmatprep.mubr.f32.mxu0 0.0
    %452 = vmatmul.mubr.f32.gmra.mrb[0].mxu0 %v385
    %v453 = vpop.f32.mrb[0].mxu0
    %v454 = vadd.f32 %v381, %v453
    %v455 = vpop.f32.mrb[0].mxu0
    %456 = vdwg.mxu0
    %v457 = vmax.f32 %v454, 0.0
    %v458 = vld [vmem:[%s4] sm:$0xff]
    %v459 = vld [vmem:[%s4 + $0x8] sm:$0xff]
    %v460 = vld [vmem:[%s4 + $0x10] sm:$0xff]
    %v461 = vld [vmem:[%s4 + $0x18] sm:$0xff]
    %v462 = vld [vmem:[%s5] sm:$0x1]
    %v464 = vlaneseq
    %v465 = vshrl.u32 %v464, 7
    %v466 = vsub.s32 0, %v465
    %v467 = vrot.slane %v462, %v466
    %vm469 = vcmask 261120
    %v471 = vsel %vm469, %v457, 0
    %473 = vmatprep.subr.mxu0 0.0
    %474 = vmatpush1.msra.mxu0 %v458
    %475 = vmatprep.subr.mxu0 0.0
    %476 = vmatpush1.msra.mxu0 %v459
    %477 = vmatprep.subr.mxu0 0.0
    %478 = vmatpush1.msra.mxu0 %v460
    %479 = vmatprep.subr.mxu0 0.0
    %480 = vmatpush1.msra.mxu0 %v461
    %481 = vmatprep.subr.mxu0 0.0
    %482 = vmatpush1.msra.mxu0 0.0
    %483 = vmatprep.subr.mxu0 0.0
    %484 = vmatpush1.msra.mxu0 0.0
    %485 = vmatprep.subr.mxu0 0.0
    %486 = vmatpush1.msra.mxu0 0.0
    %487 = vmatprep.subr.mxu0 0.0
    %488 = vmatpush1.msra.mxu0 0.0
    %489 = vmatprep.subr.mxu0 0.0
    %490 = vmatpush1.msra.mxu0 0.0
    %491 = vmatprep.subr.mxu0 0.0
    %492 = vmatpush1.msra.mxu0 0.0
    %493 = vmatprep.subr.mxu0 0.0
    %494 = vmatpush1.msra.mxu0 0.0
    %495 = vmatprep.subr.mxu0 0.0
    %496 = vmatpush1.msra.mxu0 0.0
    %497 = vmatprep.subr.mxu0 0.0
    %498 = vmatpush1.msra.mxu0 0.0
    %499 = vmatprep.subr.mxu0 0.0
    %500 = vmatpush1.msra.mxu0 0.0
    %501 = vmatprep.subr.mxu0 0.0
    %502 = vmatpush1.msra.mxu0 0.0
    %503 = vmatprep.subr.mxu0 0.0
    %504 = vmatpush1.msra.mxu0 0.0
    %505 = vmatprep.subr.mxu0 0.0
    %506 = vmatpush1.msra.mxu0 0.0
    %507 = vmatprep.subr.mxu0 0.0
    %508 = vmatpush1.msra.mxu0 0.0
    %509 = vmatprep.subr.mxu0 0.0
    %510 = vmatpush1.msra.mxu0 0.0
    %511 = vmatprep.subr.mxu0 0.0
    %512 = vmatpush1.msra.mxu0 0.0
    %513 = vmatprep.subr.mxu0 0.0
    %514 = vmatpush1.msra.mxu0 0.0
    %515 = vmatprep.subr.mxu0 0.0
    %516 = vmatpush1.msra.mxu0 0.0
    %517 = vmatprep.subr.mxu0 0.0
    %518 = vmatpush1.msra.mxu0 0.0
    %519 = vmatprep.subr.mxu0 0.0
    %520 = vmatpush1.msra.mxu0 0.0
    %521 = vmatprep.subr.mxu0 0.0
    %522 = vmatpush1.msra.mxu0 0.0
    %523 = vmatprep.subr.mxu0 0.0
    %524 = vmatpush1.msra.mxu0 0.0
    %525 = vmatprep.subr.mxu0 0.0
    %526 = vmatpush1.msra.mxu0 0.0
    %527 = vmatprep.subr.mxu0 0.0
    %528 = vmatpush1.msra.mxu0 0.0
    %529 = vmatprep.subr.mxu0 0.0
    %530 = vmatpush1.msra.mxu0 0.0
    %531 = vmatprep.subr.mxu0 0.0
    %532 = vmatpush1.msra.mxu0 0.0
    %533 = vmatprep.subr.mxu0 0.0
    %534 = vmatpush1.msra.mxu0 0.0
    %535 = vmatprep.subr.mxu0 0.0
    %536 = vmatpush1.msra.mxu0 0.0
    %537 = vmatprep.mubr.f32.mxu0 0.0
    %538 = vmatmul.mubr.f32.gmra.mrb[0].mxu0 %v471
    %v539 = vpop.f32.mrb[0].mxu0
    %v540 = vadd.f32 %v467, %v539
    %v541 = vpop.f32.mrb[0].mxu0
    %542 = vdwg.mxu0
    %v543 = vxor.u32 %v540, 2147483648
    %v544 = vmul.f32 %v543, 1.442695
    %v545 = vpow.pop %v544
    %v546 = vadd.f32 %v545, 1.0
    %v547 = vrcp.pop %v546
    %v548 = vmul.f32 1.0, %v547
    %549 = vst [vmem:[#allocation5] sm:$0xff] %v548
    // Predicated region
    $region22: #{tpu_custom_call.1} parent=1 // pred_check
      _
    $region23: #{tpu_custom_call.1} parent=1 // pred_check_branch
      %551 = sbr.rel (0) target = $region25
    $region24: #{tpu_custom_call.1} parent=1 // pred_region
      %s553 = ssub.s32 128, 128
      %554 = vsyncadd [#allocation6], %s553
      %s556 = sshll.u32 [#allocation5], 4
      %s557 = int_to_ptr.vmem [resolvable:$true] %s556
      %559 = dma.vmem_to_hbm [thread:$0]  %s557, 128, %s6, [#allocation6]
    $region25: #{tpu_custom_call.1} parent=1 // pred_fallthru
      _
    // Predicated region
    $region26: #{tpu_custom_call.1} parent=1 // pred_check
      _
    $region27: #{tpu_custom_call.1} parent=1 // pred_check_branch
      %561 = sbr.rel (0) target = $region29
    $region28: #{tpu_custom_call.1} parent=1 // pred_region
      %562 = dma.done [#allocation6], 128
    $region29: #{tpu_custom_call.1} parent=1 // pred_fallthru
      _
    %563 = vsyncpa [#allocation6], 1

</llo_original>
